<compile_context>
chip_gen: v7x
topology: tpu7x:2x2x1
jax: 0.10.0
libtpu: 0.0.40
codegen_flags: <defaults>
</compile_context>

<pallas_src>
import functools

import jax
import jax.numpy as jnp
from jax import lax
from jax.experimental import pallas as pl
from jax.experimental.pallas import tpu as pltpu


def _bert_self_output_kernel(x_ref, res_ref, w_ref, b_ref, g_ref, beta_ref,
                             o_ref, *, eps):
    # x_ref/res_ref: (tm, H)   w_ref: (H, H)   b/g/beta: (1, H)   o_ref: (tm, H)
    h = jnp.dot(x_ref[...], w_ref[...], preferred_element_type=jnp.float32)
    h = h + b_ref[...].astype(jnp.float32)

    # TODO(synk): dropout is identity at inference; training-mode dropout (RNG mask)
    # is not implemented here.

    z = h + res_ref[...].astype(jnp.float32)

    # TF-style LayerNorm over the last dim (biased variance, eps inside sqrt).
    u = jnp.mean(z, axis=-1, keepdims=True)
    d = z - u
    s = jnp.mean(d * d, axis=-1, keepdims=True)
    inv = lax.rsqrt(s + eps)
    out = (g_ref[...].astype(jnp.float32) * (d * inv)
           + beta_ref[...].astype(jnp.float32))

    o_ref[...] = out.astype(o_ref.dtype)


def bert_self_output(hidden_states, input_tensor, weight, bias, gamma, beta,
                     *, eps=1e-12, tm=256):
    """hidden_states, input_tensor: (B, S, H); weight: (H_in, H_out)=(H, H);
    bias, gamma, beta: (H,)  ->  (B, S, H)."""
    B, S, H = hidden_states.shape
    assert input_tensor.shape == (B, S, H)
    assert weight.shape == (H, H)
    M = B * S

    # Sublane-aligned row tile, never larger than the (sublane-rounded) row count.
    tm = max(8, min(tm, pl.cdiv(M, 8) * 8))
    grid_m = pl.cdiv(M, tm)

    # Flat (M, H) views; contiguous reshape, no copy. No padding: partial edge
    # blocks are handled by Pallas (each output row depends only on its own row,
    # so out-of-bounds rows never contaminate valid rows).
    x2 = hidden_states.reshape(M, H)
    r2 = input_tensor.reshape(M, H)

    b2 = bias.reshape(1, H)
    g2 = gamma.reshape(1, H)
    beta2 = beta.reshape(1, H)

    kernel = functools.partial(_bert_self_output_kernel, eps=eps)

    itemsize = jnp.dtype(hidden_states.dtype).itemsize
    cost = pl.CostEstimate(
        flops=2 * M * H * H + 8 * M * H,
        transcendentals=M,
        bytes_accessed=(3 * M * H + H * H + 3 * H) * itemsize,
    )

    out = pl.pallas_call(
        kernel,
        out_shape=jax.ShapeDtypeStruct((M, H), hidden_states.dtype),
        grid=(grid_m,),
        in_specs=[
            pl.BlockSpec((tm, H), lambda i: (i, 0)),   # activations row tile
            pl.BlockSpec((tm, H), lambda i: (i, 0)),   # residual row tile
            pl.BlockSpec((H, H), lambda i: (0, 0)),    # full weight, VMEM-resident
            pl.BlockSpec((1, H), lambda i: (0, 0)),    # bias
            pl.BlockSpec((1, H), lambda i: (0, 0)),    # LayerNorm gamma
            pl.BlockSpec((1, H), lambda i: (0, 0)),    # LayerNorm beta
        ],
        out_specs=pl.BlockSpec((tm, H), lambda i: (i, 0)),
        compiler_params=pltpu.CompilerParams(
            dimension_semantics=("parallel",),
            vmem_limit_bytes=64 * 1024 * 1024,
        ),
        cost_estimate=cost,
    )(x2, r2, weight, b2, g2, beta2)

    return out.reshape(B, S, H)


def reference(hidden_states, input_tensor, weight, bias, gamma, beta, eps=1e-12):
    h = jnp.einsum("bsh,hk->bsk", hidden_states, weight) + bias
    z = h + input_tensor
    u = jnp.mean(z, axis=-1, keepdims=True)
    s = jnp.mean((z - u) ** 2, axis=-1, keepdims=True)
    zn = (z - u) / jnp.sqrt(s + eps)
    return gamma * zn + beta


if __name__ == "__main__":
    # small BERT-like config: hidden=128, batch=2, seq=8
    B, S, H = 2, 8, 128

    key = jax.random.PRNGKey(0)
    kx, kr, kw, kb, kg, kbt = jax.random.split(key, 6)

    x = jax.random.normal(kx, (B, S, H), dtype=jnp.float32)
    res = jax.random.normal(kr, (B, S, H), dtype=jnp.float32)
    # deterministic synthetic "Linear" / LayerNorm params
    w = jax.random.normal(kw, (H, H), dtype=jnp.float32) * 0.02
    b = jax.random.normal(kb, (H,), dtype=jnp.float32) * 0.02
    gamma = 1.0 + jax.random.normal(kg, (H,), dtype=jnp.float32) * 0.02
    beta = jax.random.normal(kbt, (H,), dtype=jnp.float32) * 0.02

    out = bert_self_output(x, res, w, b, gamma, beta)
    out = jax.block_until_ready(out)

    ref = reference(x, res, w, b, gamma, beta)
    assert out.shape == (B, S, H)
    assert jnp.allclose(out, ref, atol=1e-5, rtol=1e-5)

    print("KERNEL_OK")
</pallas_src>

<mosaic_0001>
module attributes {stable_mosaic.version = 11 : i64} {
  func.func @_bert_self_output_kernel(%arg0: i32, %arg1: memref<16x128xf32, #tpu.memory_space<vmem>>, %arg2: memref<16x128xf32, #tpu.memory_space<vmem>>, %arg3: memref<128x128xf32, #tpu.memory_space<vmem>>, %arg4: memref<1x128xf32, #tpu.memory_space<vmem>>, %arg5: memref<1x128xf32, #tpu.memory_space<vmem>>, %arg6: memref<1x128xf32, #tpu.memory_space<vmem>>, %arg7: memref<16x128xf32, #tpu.memory_space<vmem>>) attributes {dimension_semantics = [#tpu.dimension_semantics<parallel>], iteration_bounds = array<i64: 1>, scalar_prefetch = 0 : i64, scratch_operands = 0 : i64, tpu.core_type = #tpu.core_type<tc>, window_params = [{transform_indices = @transform_0, window_bounds = array<i64: 16, 128>}, {transform_indices = @transform_1, window_bounds = array<i64: 16, 128>}, {pipeline_mode = #tpu.pipeline_mode<synchronous>, transform_indices = @transform_2, window_bounds = array<i64: 128, 128>}, {pipeline_mode = #tpu.pipeline_mode<synchronous>, transform_indices = @transform_3, window_bounds = array<i64: 1, 128>}, {pipeline_mode = #tpu.pipeline_mode<synchronous>, transform_indices = @transform_4, window_bounds = array<i64: 1, 128>}, {pipeline_mode = #tpu.pipeline_mode<synchronous>, transform_indices = @transform_5, window_bounds = array<i64: 1, 128>}, {transform_indices = @transform_6, window_bounds = array<i64: 16, 128>}]} {
    %c0 = arith.constant 0 : index
    %c0_0 = arith.constant 0 : index
    %0 = vector.load %arg1[%c0, %c0_0] : memref<16x128xf32, #tpu.memory_space<vmem>>, vector<16x128xf32>
    %c0_1 = arith.constant 0 : index
    %c0_2 = arith.constant 0 : index
    %1 = vector.load %arg3[%c0_1, %c0_2] : memref<128x128xf32, #tpu.memory_space<vmem>>, vector<128x128xf32>
    %cst = arith.constant dense<0.000000e+00> : vector<16x128xf32>
    %2 = tpu.matmul %0, %1, %cst {dimension_numbers = #tpu.dot_dimension_numbers<[1], [0], [0], [1], [0, 0, 1, 1], [], []>} : vector<16x128xf32>, vector<128x128xf32>, vector<16x128xf32> -> vector<16x128xf32>
    %c0_3 = arith.constant 0 : index
    %c0_4 = arith.constant 0 : index
    %3 = vector.load %arg4[%c0_3, %c0_4] : memref<1x128xf32, #tpu.memory_space<vmem>>, vector<1x128xf32>
    %4 = vector.broadcast %3 : vector<1x128xf32> to vector<16x128xf32>
    %5 = arith.addf %2, %4 : vector<16x128xf32>
    %c0_5 = arith.constant 0 : index
    %c0_6 = arith.constant 0 : index
    %6 = vector.load %arg2[%c0_5, %c0_6] : memref<16x128xf32, #tpu.memory_space<vmem>>, vector<16x128xf32>
    %7 = arith.addf %5, %6 : vector<16x128xf32>
    %cst_7 = arith.constant dense<0.000000e+00> : vector<16xf32>
    %8 = vector.multi_reduction <add>, %7, %cst_7 [1] : vector<16x128xf32> to vector<16xf32>
    %9 = vector.shape_cast %8 : vector<16xf32> to vector<16x1xf32>
    %cst_8 = arith.constant 1.280000e+02 : f32
    %10 = vector.broadcast %cst_8 : f32 to vector<16x1xf32>
    %11 = arith.divf %9, %10 : vector<16x1xf32>
    %12 = vector.broadcast %11 : vector<16x1xf32> to vector<16x128xf32>
    %13 = arith.subf %7, %12 : vector<16x128xf32>
    %14 = arith.mulf %13, %13 : vector<16x128xf32>
    %cst_9 = arith.constant dense<0.000000e+00> : vector<16xf32>
    %15 = vector.multi_reduction <add>, %14, %cst_9 [1] : vector<16x128xf32> to vector<16xf32>
    %16 = vector.shape_cast %15 : vector<16xf32> to vector<16x1xf32>
    %cst_10 = arith.constant 1.280000e+02 : f32
    %17 = vector.broadcast %cst_10 : f32 to vector<16x1xf32>
    %18 = arith.divf %16, %17 : vector<16x1xf32>
    %cst_11 = arith.constant 9.99999996E-13 : f32
    %19 = vector.broadcast %cst_11 : f32 to vector<16x1xf32>
    %20 = arith.addf %18, %19 : vector<16x1xf32>
    %21 = math.rsqrt %20 : vector<16x1xf32>
    %c0_12 = arith.constant 0 : index
    %c0_13 = arith.constant 0 : index
    %22 = vector.load %arg5[%c0_12, %c0_13] : memref<1x128xf32, #tpu.memory_space<vmem>>, vector<1x128xf32>
    %23 = vector.broadcast %21 : vector<16x1xf32> to vector<16x128xf32>
    %24 = arith.mulf %13, %23 : vector<16x128xf32>
    %25 = vector.broadcast %22 : vector<1x128xf32> to vector<16x128xf32>
    %26 = arith.mulf %25, %24 : vector<16x128xf32>
    %c0_14 = arith.constant 0 : index
    %c0_15 = arith.constant 0 : index
    %27 = vector.load %arg6[%c0_14, %c0_15] : memref<1x128xf32, #tpu.memory_space<vmem>>, vector<1x128xf32>
    %28 = vector.broadcast %27 : vector<1x128xf32> to vector<16x128xf32>
    %29 = arith.addf %26, %28 : vector<16x128xf32>
    %c0_16 = arith.constant 0 : index
    %c0_17 = arith.constant 0 : index
    %30 = vector.load %arg7[%c0_16, %c0_17] : memref<16x128xf32, #tpu.memory_space<vmem>>, vector<16x128xf32>
    tpu.vector_store %arg7[%c0_16, %c0_17], %29 {strides = array<i32>} : memref<16x128xf32, #tpu.memory_space<vmem>>, vector<16x128xf32>,
    return
  }
  func.func @transform_0(%arg0: i32) -> (i32, i32) {
    %c0_i32 = arith.constant 0 : i32
    %c0_i32_0 = arith.constant 0 : i32
    return %arg0, %c0_i32 : i32, i32
  }
  func.func @transform_1(%arg0: i32) -> (i32, i32) {
    %c0_i32 = arith.constant 0 : i32
    %c0_i32_0 = arith.constant 0 : i32
    return %arg0, %c0_i32 : i32, i32
  }
  func.func @transform_2(%arg0: i32) -> (i32, i32) {
    %c0_i32 = arith.constant 0 : i32
    %c0_i32_0 = arith.constant 0 : i32
    %c0_i32_1 = arith.constant 0 : i32
    return %c0_i32, %c0_i32_0 : i32, i32
  }
  func.func @transform_3(%arg0: i32) -> (i32, i32) {
    %c0_i32 = arith.constant 0 : i32
    %c0_i32_0 = arith.constant 0 : i32
    %c0_i32_1 = arith.constant 0 : i32
    return %c0_i32, %c0_i32_0 : i32, i32
  }
  func.func @transform_4(%arg0: i32) -> (i32, i32) {
    %c0_i32 = arith.constant 0 : i32
    %c0_i32_0 = arith.constant 0 : i32
    %c0_i32_1 = arith.constant 0 : i32
    return %c0_i32, %c0_i32_0 : i32, i32
  }
  func.func @transform_5(%arg0: i32) -> (i32, i32) {
    %c0_i32 = arith.constant 0 : i32
    %c0_i32_0 = arith.constant 0 : i32
    %c0_i32_1 = arith.constant 0 : i32
    return %c0_i32, %c0_i32_0 : i32, i32
  }
  func.func @transform_6(%arg0: i32) -> (i32, i32) {
    %c0_i32 = arith.constant 0 : i32
    %c0_i32_0 = arith.constant 0 : i32
    return %arg0, %c0_i32 : i32, i32
  }
}

</mosaic_0001>

<llo_original>
// kernel: tpu_custom_call.1
$region0: #{tpu_custom_call.1}
  #allocation0 [shape = 'u32[]', space=smem, size = 0x4, offset = 0x4, fixed_abs, tag = 'smem constant byte address 0x4 - core index']
  #allocation1 [shape = 'u32[144,128]{1,0:T(1,128)}', space=vmem, size = 0x12000, scoped, tag = 'internal scratch']
  %s0 = inlined_call_operand.hbm [shape: f32[16,128], index: 0, kind: input, shape index: {}]
  %s1 = inlined_call_operand.hbm [shape: f32[16,128], index: 1, kind: input, shape index: {}]
  %s2 = inlined_call_operand.hbm [shape: f32[128,128], index: 2, kind: input, shape index: {}]
  %s3 = inlined_call_operand.hbm [shape: f32[1,128], index: 3, kind: input, shape index: {}]
  %s4 = inlined_call_operand.hbm [shape: f32[1,128], index: 4, kind: input, shape index: {}]
  %s5 = inlined_call_operand.hbm [shape: f32[1,128], index: 5, kind: input, shape index: {}]
  %s6 = inlined_call_operand.hbm [shape: f32[16,128], index: 6, kind: output, shape index: {}]
  %s7 = sld [smem:[#allocation0]]
  $region58: #{tpu_custom_call.1} parent=0
    _
  %s9 = ssub.s32 1, %s7
  %s10 = scalar_select 0, %s9, %s7
  $region1: #{tpu_custom_call.1} parent=0
    #allocation2 [shape = 'u8[8192]{0}', space=vmem, size = 0x2000, scoped, tag = 'input window, operand 0, single buffered']
    #allocation3 [shape = 's32[1]{0}', space=sflag, size = 0x4, scoped, tag = 'scoped memory for tpu_custom_call.1']
    #allocation4 [shape = 's32[1]{0}', space=sflag, size = 0x4, scoped, tag = 'scoped memory for tpu_custom_call.1']
    #allocation5 [shape = 'u8[8192]{0}', space=vmem, size = 0x2000, scoped, tag = 'input window, operand 1, single buffered']
    #allocation6 [shape = 's32[1]{0}', space=sflag, size = 0x4, scoped, tag = 'scoped memory for tpu_custom_call.1']
    #allocation7 [shape = 'u8[65536]{0}', space=vmem, size = 0x10000, scoped, tag = 'input window, operand 2, single buffered']
    #allocation8 [shape = 'u8[512]{0}', space=vmem, size = 0x400, scoped, tag = 'input window, operand 3, single buffered']
    #allocation9 [shape = 's32[1]{0}', space=sflag, size = 0x4, scoped, tag = 'scoped memory for tpu_custom_call.1']
    #allocation10 [shape = 'u8[512]{0}', space=vmem, size = 0x400, scoped, tag = 'input window, operand 4, single buffered']
    #allocation11 [shape = 'u8[512]{0}', space=vmem, size = 0x400, scoped, tag = 'input window, operand 5, single buffered']
    #allocation12 [shape = 's32[1]{0}', space=sflag, size = 0x4, scoped, tag = 'scoped memory for tpu_custom_call.1']
    #allocation13 [shape = 'u8[8192]{0}', space=vmem, size = 0x2000, scoped, tag = 'output window, operand 0, single buffered']
    %11 = vsyncpa [#allocation3], 0
    %12 = vsyncpa [#allocation6], 0
    %13 = vsyncpa [#allocation9], 0
    %14 = vsyncpa [#allocation12], 0
    %15 = vsyncpa [#allocation4], 0
    // Predicated region
    $region2: #{tpu_custom_call.1} parent=1 // pred_check
      _
    $region3: #{tpu_custom_call.1} parent=1 // pred_check_branch
      %17 = sbr.rel (0) target = $region5
    $region4: #{tpu_custom_call.1} parent=1 // pred_region
      %s19 = ssub.s32 256, 256
      %20 = vsyncadd [#allocation3], %s19
      %s21 = sshll.u32 [#allocation2], 4
      %s22 = int_to_ptr.vmem [resolvable:$true] %s21
      %27 = dma.hbm_to_vmem [thread:$0]  %s0, 256, %s22, [#allocation3], 128, 128, 8
    $region5: #{tpu_custom_call.1} parent=1 // pred_fallthru
      _
    // Predicated region
    $region6: #{tpu_custom_call.1} parent=1 // pred_check
      _
    $region7: #{tpu_custom_call.1} parent=1 // pred_check_branch
      %29 = sbr.rel (0) target = $region9
    $region8: #{tpu_custom_call.1} parent=1 // pred_region
      %s31 = ssub.s32 256, 256
      %32 = vsyncadd [#allocation6], %s31
      %s33 = sshll.u32 [#allocation5], 4
      %s34 = int_to_ptr.vmem [resolvable:$true] %s33
      %39 = dma.hbm_to_vmem [thread:$0]  %s1, 256, %s34, [#allocation6], 128, 128, 8
    $region9: #{tpu_custom_call.1} parent=1 // pred_fallthru
      _
    // Predicated region
    $region10: #{tpu_custom_call.1} parent=1 // pred_check
      _
    $region11: #{tpu_custom_call.1} parent=1 // pred_check_branch
      %41 = sbr.rel (0) target = $region13
    $region12: #{tpu_custom_call.1} parent=1 // pred_region
      %s43 = ssub.s32 2048, 2048
      %44 = vsyncadd [#allocation6], %s43
      %s45 = sshll.u32 [#allocation7], 4
      %s46 = int_to_ptr.vmem [resolvable:$true] %s45
      %51 = dma.hbm_to_vmem [thread:$0]  %s2, 2048, %s46, [#allocation6], 128, 128, 8
    $region13: #{tpu_custom_call.1} parent=1 // pred_fallthru
      _
    // Predicated region
    $region14: #{tpu_custom_call.1} parent=1 // pred_check
      _
    $region15: #{tpu_custom_call.1} parent=1 // pred_check_branch
      %53 = sbr.rel (0) target = $region17
    $region16: #{tpu_custom_call.1} parent=1 // pred_region
      %s55 = ssub.s32 16, 16
      %56 = vsyncadd [#allocation9], %s55
      %s58 = sshll.u32 [#allocation8], 4
      %s59 = int_to_ptr.vmem [resolvable:$true] %s58
      %61 = dma.hbm_to_vmem [thread:$0]  %s3, 16, %s59, [#allocation9]
    $region17: #{tpu_custom_call.1} parent=1 // pred_fallthru
      _
    // Predicated region
    $region18: #{tpu_custom_call.1} parent=1 // pred_check
      _
    $region19: #{tpu_custom_call.1} parent=1 // pred_check_branch
      %63 = sbr.rel (0) target = $region21
    $region20: #{tpu_custom_call.1} parent=1 // pred_region
      %s65 = ssub.s32 16, 16
      %66 = vsyncadd [#allocation9], %s65
      %s68 = sshll.u32 [#allocation10], 4
      %s69 = int_to_ptr.vmem [resolvable:$true] %s68
      %71 = dma.hbm_to_vmem [thread:$0]  %s4, 16, %s69, [#allocation9]
    $region21: #{tpu_custom_call.1} parent=1 // pred_fallthru
      _
    // Predicated region
    $region22: #{tpu_custom_call.1} parent=1 // pred_check
      _
    $region23: #{tpu_custom_call.1} parent=1 // pred_check_branch
      %73 = sbr.rel (0) target = $region25
    $region24: #{tpu_custom_call.1} parent=1 // pred_region
      %s75 = ssub.s32 16, 16
      %76 = vsyncadd [#allocation12], %s75
      %s78 = sshll.u32 [#allocation11], 4
      %s79 = int_to_ptr.vmem [resolvable:$true] %s78
      %81 = dma.hbm_to_vmem [thread:$0]  %s5, 16, %s79, [#allocation12]
    $region25: #{tpu_custom_call.1} parent=1 // pred_fallthru
      _
    // Predicated region
    $region26: #{tpu_custom_call.1} parent=1 // pred_check
      _
    $region27: #{tpu_custom_call.1} parent=1 // pred_check_branch
      %83 = sbr.rel (0) target = $region29
    $region28: #{tpu_custom_call.1} parent=1 // pred_region
      %84 = dma.done [#allocation3], 256
    $region29: #{tpu_custom_call.1} parent=1 // pred_fallthru
      _
    // Predicated region
    $region30: #{tpu_custom_call.1} parent=1 // pred_check
      _
    $region31: #{tpu_custom_call.1} parent=1 // pred_check_branch
      %86 = sbr.rel (0) target = $region33
    $region32: #{tpu_custom_call.1} parent=1 // pred_region
      %87 = dma.done [#allocation6], 256
    $region33: #{tpu_custom_call.1} parent=1 // pred_fallthru
      _
    // Predicated region
    $region34: #{tpu_custom_call.1} parent=1 // pred_check
      _
    $region35: #{tpu_custom_call.1} parent=1 // pred_check_branch
      %89 = sbr.rel (0) target = $region37
    $region36: #{tpu_custom_call.1} parent=1 // pred_region
      %90 = dma.done [#allocation6], 2048
    $region37: #{tpu_custom_call.1} parent=1 // pred_fallthru
      _
    // Predicated region
    $region38: #{tpu_custom_call.1} parent=1 // pred_check
      _
    $region39: #{tpu_custom_call.1} parent=1 // pred_check_branch
      %92 = sbr.rel (0) target = $region41
    $region40: #{tpu_custom_call.1} parent=1 // pred_region
      %93 = dma.done [#allocation9], 16
    $region41: #{tpu_custom_call.1} parent=1 // pred_fallthru
      _
    // Predicated region
    $region42: #{tpu_custom_call.1} parent=1 // pred_check
      _
    $region43: #{tpu_custom_call.1} parent=1 // pred_check_branch
      %95 = sbr.rel (0) target = $region45
    $region44: #{tpu_custom_call.1} parent=1 // pred_region
      %96 = dma.done [#allocation9], 16
    $region45: #{tpu_custom_call.1} parent=1 // pred_fallthru
      _
    // Predicated region
    $region46: #{tpu_custom_call.1} parent=1 // pred_check
      _
    $region47: #{tpu_custom_call.1} parent=1 // pred_check_branch
      %98 = sbr.rel (0) target = $region49
    $region48: #{tpu_custom_call.1} parent=1 // pred_region
      %99 = dma.done [#allocation12], 16
    $region49: #{tpu_custom_call.1} parent=1 // pred_fallthru
      _
    %v100 = vld [vmem:[#allocation2] sm:$0xff]
    %v101 = vld [vmem:[#allocation2 + $0x8] sm:$0xff]
    %v102 = vld [vmem:[#allocation7] sm:$0xff]
    %v103 = vld [vmem:[#allocation7 + $0x8] sm:$0xff]
    %v104 = vld [vmem:[#allocation7 + $0x10] sm:$0xff]
    %v105 = vld [vmem:[#allocation7 + $0x18] sm:$0xff]
    %v106 = vld [vmem:[#allocation7 + $0x20] sm:$0xff]
    %v107 = vld [vmem:[#allocation7 + $0x28] sm:$0xff]
    %v108 = vld [vmem:[#allocation7 + $0x30] sm:$0xff]
    %v109 = vld [vmem:[#allocation7 + $0x38] sm:$0xff]
    %v110 = vld [vmem:[#allocation7 + $0x40] sm:$0xff]
    %v111 = vld [vmem:[#allocation7 + $0x48] sm:$0xff]
    %v112 = vld [vmem:[#allocation7 + $0x50] sm:$0xff]
    %v113 = vld [vmem:[#allocation7 + $0x58] sm:$0xff]
    %v114 = vld [vmem:[#allocation7 + $0x60] sm:$0xff]
    %v115 = vld [vmem:[#allocation7 + $0x68] sm:$0xff]
    %v116 = vld [vmem:[#allocation7 + $0x70] sm:$0xff]
    %v117 = vld [vmem:[#allocation7 + $0x78] sm:$0xff]
    %v118 = vld [vmem:[#allocation8] sm:$0x1]
    %v120 = vlaneseq
    %v121 = vshrl.u32 %v120, 7
    %v122 = vsub.s32 0, %v121
    %v123 = vrot.slane %v118, %v122
    %125 = vmatprep.subr.mxu0 0.0
    %126 = vmatpush1.msra.mxu0 %v102
    %127 = vmatprep.subr.mxu0 0.0
    %128 = vmatpush1.msra.mxu0 %v103
    %129 = vmatprep.subr.mxu0 0.0
    %130 = vmatpush1.msra.mxu0 %v104
    %131 = vmatprep.subr.mxu0 0.0
    %132 = vmatpush1.msra.mxu0 %v105
    %133 = vmatprep.subr.mxu0 0.0
    %134 = vmatpush1.msra.mxu0 %v106
    %135 = vmatprep.subr.mxu0 0.0
    %136 = vmatpush1.msra.mxu0 %v107
    %137 = vmatprep.subr.mxu0 0.0
    %138 = vmatpush1.msra.mxu0 %v108
    %139 = vmatprep.subr.mxu0 0.0
    %140 = vmatpush1.msra.mxu0 %v109
    %141 = vmatprep.subr.mxu0 0.0
    %142 = vmatpush1.msra.mxu0 %v110
    %143 = vmatprep.subr.mxu0 0.0
    %144 = vmatpush1.msra.mxu0 %v111
    %145 = vmatprep.subr.mxu0 0.0
    %146 = vmatpush1.msra.mxu0 %v112
    %147 = vmatprep.subr.mxu0 0.0
    %148 = vmatpush1.msra.mxu0 %v113
    %149 = vmatprep.subr.mxu0 0.0
    %150 = vmatpush1.msra.mxu0 %v114
    %151 = vmatprep.subr.mxu0 0.0
    %152 = vmatpush1.msra.mxu0 %v115
    %153 = vmatprep.subr.mxu0 0.0
    %154 = vmatpush1.msra.mxu0 %v116
    %155 = vmatprep.subr.mxu0 0.0
    %156 = vmatpush1.msra.mxu0 %v117
    %157 = vmatprep.subr.mxu0 0.0
    %158 = vmatpush1.msra.mxu0 0.0
    %159 = vmatprep.subr.mxu0 0.0
    %160 = vmatpush1.msra.mxu0 0.0
    %161 = vmatprep.subr.mxu0 0.0
    %162 = vmatpush1.msra.mxu0 0.0
    %163 = vmatprep.subr.mxu0 0.0
    %164 = vmatpush1.msra.mxu0 0.0
    %165 = vmatprep.subr.mxu0 0.0
    %166 = vmatpush1.msra.mxu0 0.0
    %167 = vmatprep.subr.mxu0 0.0
    %168 = vmatpush1.msra.mxu0 0.0
    %169 = vmatprep.subr.mxu0 0.0
    %170 = vmatpush1.msra.mxu0 0.0
    %171 = vmatprep.subr.mxu0 0.0
    %172 = vmatpush1.msra.mxu0 0.0
    %173 = vmatprep.subr.mxu0 0.0
    %174 = vmatpush1.msra.mxu0 0.0
    %175 = vmatprep.subr.mxu0 0.0
    %176 = vmatpush1.msra.mxu0 0.0
    %177 = vmatprep.subr.mxu0 0.0
    %178 = vmatpush1.msra.mxu0 0.0
    %179 = vmatprep.subr.mxu0 0.0
    %180 = vmatpush1.msra.mxu0 0.0
    %181 = vmatprep.subr.mxu0 0.0
    %182 = vmatpush1.msra.mxu0 0.0
    %183 = vmatprep.subr.mxu0 0.0
    %184 = vmatpush1.msra.mxu0 0.0
    %185 = vmatprep.subr.mxu0 0.0
    %186 = vmatpush1.msra.mxu0 0.0
    %187 = vmatprep.subr.mxu0 0.0
    %188 = vmatpush1.msra.mxu0 0.0
    %189 = vmatprep.mubr.f32.mxu0 0.0
    %190 = vmatmul.mubr.f32.gmra.mrb[0].mxu0 %v100
    %v191 = vpop.f32.mrb[0].mxu0
    %v192 = vadd.f32 %v123, %v191
    %v193 = vpop.f32.mrb[0].mxu0
    %194 = vmatprep.mubr.f32.mxu0 0.0
    %195 = vmatmul.mubr.f32.gmra.mrb[0].mxu0 %v101
    %v196 = vpop.f32.mrb[0].mxu0
    %v197 = vadd.f32 %v123, %v196
    %v198 = vpop.f32.mrb[0].mxu0
    %199 = vdwg.mxu0
    %v200 = vld [vmem:[#allocation5] sm:$0xff]
    %v201 = vld [vmem:[#allocation5 + $0x8] sm:$0xff]
    %v202 = vadd.f32 %v192, %v200
    %v203 = vadd.f32 %v197, %v201
    %204 = vadd.xlane.f32.xlu0 %v202
    %v205 = vpop.xlane.xlu0 %204
    %206 = vadd.xlane.f32.xlu0 %v203
    %v207 = vpop.xlane.xlu0 %206
    %v208 = vrcp.pop 128.0
    %v209 = vmul.f32 %v205, %v208
    %v210 = vmul.f32 %v207, %v208
    %v211 = vsub.f32 %v202, %v209
    %v212 = vsub.f32 %v203, %v210
    %v213 = vmul.f32 %v211, %v211
    %v214 = vmul.f32 %v212, %v212
    %215 = vadd.xlane.f32.xlu0 %v213
    %v216 = vpop.xlane.xlu0 %215
    %217 = vadd.xlane.f32.xlu0 %v214
    %v218 = vpop.xlane.xlu0 %217
    %v219 = vmul.f32 %v216, %v208
    %v220 = vmul.f32 %v218, %v208
    %v221 = vadd.f32 %v219, 1e-12
    %v222 = vadd.f32 %v220, 1e-12
    %v223 = vrsqrt.pop %v221
    %v224 = vrsqrt.pop %v222
    %v225 = vld [vmem:[#allocation10] sm:$0x1]
    %v226 = vmul.f32 %v211, %v223
    %v227 = vmul.f32 %v212, %v224
    %v229 = vlaneseq
    %v230 = vshrl.u32 %v229, 7
    %v231 = vsub.s32 0, %v230
    %v232 = vrot.slane %v225, %v231
    %v234 = vmul.f32 %v232, %v226
    %v235 = vmul.f32 %v232, %v227
    %v236 = vld [vmem:[#allocation11] sm:$0x1]
    %v238 = vlaneseq
    %v239 = vshrl.u32 %v238, 7
    %v240 = vsub.s32 0, %v239
    %v241 = vrot.slane %v236, %v240
    %v243 = vadd.f32 %v234, %v241
    %v244 = vadd.f32 %v235, %v241
    %245 = vst [vmem:[#allocation13] sm:$0xff] %v243
    %246 = vst [vmem:[#allocation13 + $0x8] sm:$0xff] %v244
    // Predicated region
    $region50: #{tpu_custom_call.1} parent=1 // pred_check
      _
    $region51: #{tpu_custom_call.1} parent=1 // pred_check_branch
      %248 = sbr.rel (0) target = $region53
    $region52: #{tpu_custom_call.1} parent=1 // pred_region
      %s250 = ssub.s32 256, 256
      %251 = vsyncadd [#allocation4], %s250
      %s252 = sshll.u32 [#allocation13], 4
      %s253 = int_to_ptr.vmem [resolvable:$true] %s252
      %258 = dma.vmem_to_hbm [thread:$0]  %s253, 256, %s6, [#allocation4], 128, 128, 8
    $region53: #{tpu_custom_call.1} parent=1 // pred_fallthru
      _
    // Predicated region
    $region54: #{tpu_custom_call.1} parent=1 // pred_check
      _
    $region55: #{tpu_custom_call.1} parent=1 // pred_check_branch
      %260 = sbr.rel (0) target = $region57
    $region56: #{tpu_custom_call.1} parent=1 // pred_region
      %261 = dma.done [#allocation4], 256
    $region57: #{tpu_custom_call.1} parent=1 // pred_fallthru
      _
    %262 = vsyncpa [#allocation3], 1
    %263 = vsyncpa [#allocation6], 1
    %264 = vsyncpa [#allocation9], 1
    %265 = vsyncpa [#allocation12], 1
    %266 = vsyncpa [#allocation4], 1

</llo_original>
